<compile_context>
chip_gen: v6e
topology: v6e:2x2x1
jax: 0.10.0
libtpu: 0.0.40
codegen_flags: <defaults>
</compile_context>

<pallas_src>
import functools

import jax
import jax.numpy as jnp
from jax.experimental import pallas as pl
from jax.experimental.pallas import tpu as pltpu


def _round_up(n, m):
    return ((n + m - 1) // m) * m


def _cdiv(a, b):
    return (a + b - 1) // b


# ----------------------------------------------------------------------------
# Kernel
# ----------------------------------------------------------------------------
def attention_lstm_kernel(x_ref, w_ih_ref, b_gates_ref, w_out_ref, b_out_ref,
                          o_ref, *scratch, hidden, hp3, nk, approx_recip):
    """One (batch_tile, k_tile) grid step.

    Gate layout along lanes of the packed block: [i | g | o | zero-pad],
    each gate `hidden` lanes wide, total padded to hp3 (multiple of 128).
    """

    def finalize(gates):
        # gates: (tb, hp3) f32.
        # sigmoid via exp + EUP reciprocal (a plain divide burns VALU slots).
        sig = pl.reciprocal(1.0 + jnp.exp(-gates), approx=approx_recip)
        th = jnp.tanh(gates)
        # Rotate the g / o gate lanes down onto lanes [0, hidden) so the
        # recombination is pure elementwise work on one packed block
        # (XLU rotate uses a free slot; avoids per-gate 128-lane padding).
        g_al = pltpu.roll(th, hp3 - hidden, 1)        # tanh(g)    at lanes [0, H)
        o_al = pltpu.roll(sig, hp3 - 2 * hidden, 1)   # sigmoid(o) at lanes [0, H)
        c = sig * g_al                                 # c = sigmoid(i) * tanh(g)  (c0 == 0)
        h = o_al * jnp.tanh(c)                         # h valid on lanes [0, H)
        # Lanes >= H hold finite garbage; w_out rows >= H are zero, so the
        # projection ignores them.  Attention over a length-1 sequence is the
        # identity (softmax == 1), so ctx == h and the attention params vanish.
        out = jnp.dot(h, w_out_ref[...], preferred_element_type=jnp.float32)
        d_out = o_ref.shape[-1]
        o_ref[...] = (out[:, :d_out] + b_out_ref[...]).astype(o_ref.dtype)

    if nk == 1:
        # Weights-resident path: single gate matmul per batch tile.
        gates = jnp.dot(x_ref[...], w_ih_ref[...],
                        preferred_element_type=jnp.float32)
        finalize(gates + b_gates_ref[...])
    else:
        # K-tiled path: accumulate partial gate matmuls over d_in.
        acc_ref, = scratch
        k = pl.program_id(1)

        @pl.when(k == 0)
        def _init():
            acc_ref[...] = jnp.zeros_like(acc_ref)

        acc_ref[...] += jnp.dot(x_ref[...], w_ih_ref[...],
                                preferred_element_type=jnp.float32)

        @pl.when(k == nk - 1)
        def _done():
            finalize(acc_ref[...] + b_gates_ref[...])


# ----------------------------------------------------------------------------
# Wrapper
# ----------------------------------------------------------------------------
def attention_lstm_forward(x, packed, *, batch_tile=None, use_bf16_inputs=True,
                           approx_sigmoid=True, k_tile=None,
                           weight_vmem_budget=24 << 20,
                           single_buffer_weights=True):
    B, d_in = x.shape
    H = packed["hidden"]
    hp3 = packed["hp3"]
    d_out = packed["b_out_p"].shape[1]
    dop_mm = packed["w_out_p"].shape[1]

    in_dtype = jnp.bfloat16 if use_bf16_inputs else jnp.float32
    itemsize = 2 if use_bf16_inputs else 4
    x = x.astype(in_dtype)
    w_ih = packed["w_ih_p"].astype(in_dtype)

    # ---- K (d_in) tiling: weights resident when they fit, else tile over d_in
    if k_tile is not None:
        assert k_tile % 128 == 0
        tk = min(k_tile, _round_up(d_in, 128))
    elif d_in * hp3 * itemsize <= weight_vmem_budget:
        tk = d_in
    else:
        tk = max(128, ((weight_vmem_budget // (2 * hp3 * itemsize)) // 128) * 128)
    if tk >= d_in:
        tk, nk = d_in, 1
    else:
        d_in_p = _round_up(d_in, tk)
        if d_in_p != d_in:
            x = jnp.pad(x, ((0, 0), (0, d_in_p - d_in)))
            w_ih = jnp.pad(w_ih, ((0, d_in_p - d_in), (0, 0)))
        d_in = d_in_p
        nk = d_in // tk

    # ---- batch tiling (16-row alignment for bf16 sublane packing)
    row_align = 16 if use_bf16_inputs else 8
    if batch_tile is None:
        try:
            vmem_cap = pltpu.get_tpu_info().vmem_capacity_bytes
        except Exception:
            vmem_cap = 64 << 20
        batch_tile = 1024 if vmem_cap >= (100 << 20) else 512
    batch_tile = _round_up(batch_tile, row_align)
    tb = min(batch_tile, _round_up(max(B, 1), row_align))
    if B >= 2 * row_align:
        # Ensure >= 2 batch grid steps so "parallel" can shard over v7x's 2 TCs.
        tb = min(tb, _round_up(_cdiv(B, 2), row_align))
    bp = _round_up(B, tb)
    if bp != B:
        x = jnp.pad(x, ((0, bp - B), (0, 0)))
    nb = bp // tb

    b_gates = packed["b_gates_p"]
    w_out = packed["w_out_p"]
    b_out = packed["b_out_p"]

    kernel = functools.partial(attention_lstm_kernel, hidden=H, hp3=hp3,
                               nk=nk, approx_recip=approx_sigmoid)

    flops = 2 * bp * d_in * hp3 + 2 * bp * hp3 * dop_mm
    transcendentals = 4 * bp * hp3
    bytes_accessed = (bp * d_in * itemsize + d_in * hp3 * itemsize
                      + hp3 * 4 + hp3 * dop_mm * 4 + d_out * 4 + bp * d_out * 4)

    def build_and_run(single_buffer):
        inv = {"pipeline_mode": pl.Buffered(1)} if single_buffer else {}
        w_bufs = 1 if (single_buffer and nk == 1) else 2
        c_bufs = 1 if single_buffer else 2
        in_specs = [
            pl.BlockSpec((tb, tk), lambda i, k: (i, k)),                  # x tile
            pl.BlockSpec((tk, hp3), lambda i, k: (k, 0),
                         **(inv if nk == 1 else {})),                     # gate weights
            pl.BlockSpec((1, hp3), lambda i, k: (0, 0), **inv),           # gate biases
            pl.BlockSpec((hp3, dop_mm), lambda i, k: (0, 0), **inv),      # out weights
            pl.BlockSpec((1, d_out), lambda i, k: (0, 0), **inv),         # out bias
        ]
        out_spec = pl.BlockSpec((tb, d_out), lambda i, k: (i, 0))
        scratch = [pltpu.VMEM((tb, hp3), jnp.float32)] if nk > 1 else []

        vmem_need = (2 * tb * tk * itemsize                 # x (double-buffered)
                     + w_bufs * tk * hp3 * itemsize         # gate weights
                     + c_bufs * 8 * hp3 * 4                 # gate bias (sublane-padded)
                     + c_bufs * hp3 * dop_mm * 4            # output weights
                     + c_bufs * 8 * max(d_out, 128) * 4     # output bias
                     + 2 * tb * d_out * 4                   # output tile
                     + (tb * hp3 * 4 if nk > 1 else 0))     # accumulator
        vmem_limit = int(min(max(2 * vmem_need, 32 << 20), 64 << 20))

        call = pl.pallas_call(
            kernel,
            out_shape=jax.ShapeDtypeStruct((bp, d_out), jnp.float32),
            grid_spec=pltpu.PrefetchScalarGridSpec(
                num_scalar_prefetch=0,
                grid=(nb, nk),
                in_specs=in_specs,
                out_specs=out_spec,
                scratch_shapes=scratch),
            compiler_params=pltpu.CompilerParams(
                dimension_semantics=("parallel", "arbitrary"),
                vmem_limit_bytes=vmem_limit),
            cost_estimate=pl.CostEstimate(flops=flops,
                                          transcendentals=transcendentals,
                                          bytes_accessed=bytes_accessed),
        )
        out = call(x, w_ih, b_gates, w_out, b_out)
        return jax.block_until_ready(out)

    try:
        out = build_and_run(single_buffer_weights)
    except Exception:
        if not single_buffer_weights:
            raise
        # pl.Buffered(1) unsupported in this jax build -> default double-buffering.
        out = build_and_run(False)

    return out[:B]


# ----------------------------------------------------------------------------
# Parameter init (PyTorch-default-style) and packing for the kernel layout
# ----------------------------------------------------------------------------
def init_params(key, input_size, output_size, hidden_size):
    ks = jax.random.split(key, 7)
    bound = 1.0 / jnp.sqrt(hidden_size)
    u = lambda k, shp: jax.random.uniform(k, shp, minval=-bound, maxval=bound,
                                          dtype=jnp.float32)
    return {
        "w_ih": u(ks[0], (4 * hidden_size, input_size)),   # gate order i, f, g, o
        "b_ih": u(ks[1], (4 * hidden_size,)),
        "b_hh": u(ks[2], (4 * hidden_size,)),
        "w_attn": u(ks[3], (1, hidden_size)),               # unused: softmax(len-1)==1
        "b_attn": u(ks[4], (1,)),                           # unused: softmax(len-1)==1
        "w_out": u(ks[5], (output_size, hidden_size)),
        "b_out": u(ks[6], (output_size,)),
    }


def pack_params(raw, input_size, output_size, hidden_size):
    """Pre-transpose, drop the forget gate, pack [i|g|o] into one padded lane block."""
    H = hidden_size
    hp3 = _round_up(3 * H, 128)                 # total packed gate width
    dop_mm = _round_up(output_size, 128)        # lane-dense width for the out matmul

    w_ih = raw["w_ih"]                          # (4H, D_in), PyTorch order i, f, g, o
    b = raw["b_ih"] + raw["b_hh"]
    d_in = w_ih.shape[1]

    def gate(idx):
        return w_ih[idx * H:(idx + 1) * H, :].T, b[idx * H:(idx + 1) * H]

    w_i, b_i = gate(0)   # input gate
    w_g, b_g = gate(2)   # cell candidate
    w_o, b_o = gate(3)   # output gate    (forget gate dropped: c0 == 0)

    w_ih_p = jnp.zeros((d_in, hp3), jnp.float32)
    b_gates_p = jnp.zeros((1, hp3), jnp.float32)
    for k, (wk, bk) in enumerate(((w_i, b_i), (w_g, b_g), (w_o, b_o))):
        w_ih_p = w_ih_p.at[:, k * H:(k + 1) * H].set(wk)
        b_gates_p = b_gates_p.at[0, k * H:(k + 1) * H].set(bk)

    w_out_p = jnp.zeros((hp3, dop_mm), jnp.float32).at[:H, :output_size].set(
        raw["w_out"].T)
    b_out_p = jnp.zeros((1, output_size), jnp.float32).at[0, :].set(raw["b_out"])

    return {
        "w_ih_p": w_ih_p,        # (D_in, hp3)        packed [i|g|o|0]
        "b_gates_p": b_gates_p,  # (1, hp3)
        "w_out_p": w_out_p,      # (hp3, dop_mm)      rows >= H are zero
        "b_out_p": b_out_p,      # (1, output_size)
        "hp3": hp3,
        "hidden": H,
    }


# ----------------------------------------------------------------------------
# Pure-JAX reference of the full original PyTorch forward (incl. attention)
# ----------------------------------------------------------------------------
def reference_forward(x, raw, hidden_size):
    H = hidden_size
    hi = jax.lax.Precision.HIGHEST
    gates = jnp.dot(x, raw["w_ih"].T, precision=hi) + raw["b_ih"] + raw["b_hh"]
    i_g = jax.nn.sigmoid(gates[:, 0 * H:1 * H])
    f_g = jax.nn.sigmoid(gates[:, 1 * H:2 * H])
    g_g = jnp.tanh(gates[:, 2 * H:3 * H])
    o_g = jax.nn.sigmoid(gates[:, 3 * H:4 * H])
    c = f_g * 0.0 + i_g * g_g                      # c0 == 0
    h = o_g * jnp.tanh(c)                          # (B, H) == lstm_out[:, 0, :]
    lstm_out = h[:, None, :]                       # (B, 1, H)
    attn = jnp.tanh(jnp.dot(lstm_out, raw["w_attn"].T, precision=hi)
                    + raw["b_attn"])               # (B, 1, 1)
    attn = jax.nn.softmax(attn, axis=1)            # length-1 softmax == 1
    ctx = jnp.sum(lstm_out * attn, axis=1)         # (B, H)
    return jnp.dot(ctx, raw["w_out"].T, precision=hi) + raw["b_out"]


if __name__ == "__main__":
    # ---- Config 1: small shapes matching the module defaults ---------------
    batch, input_size, hidden_size, output_size = 4, 16, 4, 8
    key = jax.random.PRNGKey(0)
    k_x, k_p, k_x2, k_p2 = jax.random.split(key, 4)

    x = jax.random.normal(k_x, (batch, input_size), dtype=jnp.float32)
    raw = init_params(k_p, input_size, output_size, hidden_size)
    packed = pack_params(raw, input_size, output_size, hidden_size)
    ref = reference_forward(x, raw, hidden_size)

    # 1) default fast path: bf16 gate-matmul inputs + approx EUP reciprocal.
    out_fast = jax.block_until_ready(attention_lstm_forward(x, packed))
    assert out_fast.shape == (batch, output_size)
    assert jnp.allclose(out_fast, ref, atol=5e-2, rtol=1e-1)

    # 2) exact f32 path (full-precision sigmoid reciprocal): tight tolerance.
    out_exact = jax.block_until_ready(
        attention_lstm_forward(x, packed, use_bf16_inputs=False,
                               approx_sigmoid=False))
    assert out_exact.shape == (batch, output_size)
    assert jnp.allclose(out_exact, ref, atol=1e-4, rtol=1e-3)

    # ---- Config 2: exercise the K-tiled accumulator path + multi batch tiles
    B2, D2, H2, O2 = 40, 256, 48, 8
    x2 = jax.random.normal(k_x2, (B2, D2), dtype=jnp.float32)
    raw2 = init_params(k_p2, D2, O2, H2)
    packed2 = pack_params(raw2, D2, O2, H2)
    out2 = jax.block_until_ready(
        attention_lstm_forward(x2, packed2, use_bf16_inputs=False,
                               approx_sigmoid=False, k_tile=128))
    ref2 = reference_forward(x2, raw2, H2)
    assert out2.shape == (B2, O2)
    assert jnp.allclose(out2, ref2, atol=5e-4, rtol=5e-3)

    print("KERNEL_OK")
</pallas_src>

<mosaic_0001>
module attributes {stable_mosaic.version = 11 : i64} {
  func.func @attention_lstm_kernel(%arg0: i32, %arg1: i32, %arg2: memref<16x16xbf16, #tpu.memory_space<vmem>>, %arg3: memref<16x128xbf16, #tpu.memory_space<vmem>>, %arg4: memref<1x128xf32, #tpu.memory_space<vmem>>, %arg5: memref<128x128xf32, #tpu.memory_space<vmem>>, %arg6: memref<1x8xf32, #tpu.memory_space<vmem>>, %arg7: memref<16x8xf32, #tpu.memory_space<vmem>>) attributes {dimension_semantics = [#tpu.dimension_semantics<parallel>, #tpu.dimension_semantics<arbitrary>], iteration_bounds = array<i64: 1, 1>, scalar_prefetch = 0 : i64, scratch_operands = 0 : i64, tpu.core_type = #tpu.core_type<tc>, window_params = [{transform_indices = @transform_0, window_bounds = array<i64: 16, 16>}, {pipeline_mode = #tpu.pipeline_mode<synchronous>, transform_indices = @transform_1, window_bounds = array<i64: 16, 128>}, {pipeline_mode = #tpu.pipeline_mode<synchronous>, transform_indices = @transform_2, window_bounds = array<i64: 1, 128>}, {pipeline_mode = #tpu.pipeline_mode<synchronous>, transform_indices = @transform_3, window_bounds = array<i64: 128, 128>}, {pipeline_mode = #tpu.pipeline_mode<synchronous>, transform_indices = @transform_4, window_bounds = array<i64: 1, 8>}, {transform_indices = @transform_5, window_bounds = array<i64: 16, 8>}]} {
    %c0 = arith.constant 0 : index
    %c0_0 = arith.constant 0 : index
    %0 = vector.load %arg2[%c0, %c0_0] : memref<16x16xbf16, #tpu.memory_space<vmem>>, vector<16x16xbf16>
    %c0_1 = arith.constant 0 : index
    %c0_2 = arith.constant 0 : index
    %1 = vector.load %arg3[%c0_1, %c0_2] : memref<16x128xbf16, #tpu.memory_space<vmem>>, vector<16x128xbf16>
    %cst = arith.constant dense<0.000000e+00> : vector<16x128xf32>
    %2 = tpu.matmul %0, %1, %cst {dimension_numbers = #tpu.dot_dimension_numbers<[1], [0], [0], [1], [0, 0, 1, 1], [], []>} : vector<16x16xbf16>, vector<16x128xbf16>, vector<16x128xf32> -> vector<16x128xf32>
    %c0_3 = arith.constant 0 : index
    %c0_4 = arith.constant 0 : index
    %3 = vector.load %arg4[%c0_3, %c0_4] : memref<1x128xf32, #tpu.memory_space<vmem>>, vector<1x128xf32>
    %4 = vector.broadcast %3 : vector<1x128xf32> to vector<16x128xf32>
    %5 = arith.addf %2, %4 : vector<16x128xf32>
    %cst_5 = arith.constant 0.000000e+00 : f32
    %6 = vector.broadcast %cst_5 : f32 to vector<16x128xf32>
    %7 = arith.subf %6, %5 : vector<16x128xf32>
    %8 = math.exp %7 : vector<16x128xf32>
    %cst_6 = arith.constant 1.000000e+00 : f32
    %9 = vector.broadcast %cst_6 : f32 to vector<16x128xf32>
    %10 = arith.addf %9, %8 : vector<16x128xf32>
    %11 = tpu.reciprocal %10 {approx = true} : vector<16x128xf32> -> vector<16x128xf32>
    %12 = math.tanh %5 : vector<16x128xf32>
    %c124_i32 = arith.constant 124 : i32
    %13 = tpu.dynamic_rotate %12 by %c124_i32 dim 1 : vector<16x128xf32>, i32 -> vector<16x128xf32>
    %c120_i32 = arith.constant 120 : i32
    %14 = tpu.dynamic_rotate %11 by %c120_i32 dim 1 : vector<16x128xf32>, i32 -> vector<16x128xf32>
    %15 = arith.mulf %11, %13 : vector<16x128xf32>
    %16 = math.tanh %15 : vector<16x128xf32>
    %17 = arith.mulf %14, %16 : vector<16x128xf32>
    %c0_7 = arith.constant 0 : index
    %c0_8 = arith.constant 0 : index
    %18 = vector.load %arg5[%c0_7, %c0_8] : memref<128x128xf32, #tpu.memory_space<vmem>>, vector<128x128xf32>
    %cst_9 = arith.constant dense<0.000000e+00> : vector<16x128xf32>
    %19 = tpu.matmul %17, %18, %cst_9 {dimension_numbers = #tpu.dot_dimension_numbers<[1], [0], [0], [1], [0, 0, 1, 1], [], []>} : vector<16x128xf32>, vector<128x128xf32>, vector<16x128xf32> -> vector<16x128xf32>
    %20 = vector.extract_strided_slice %19 {offsets = [0, 0], sizes = [16, 8], strides = [1, 1]} : vector<16x128xf32> to vector<16x8xf32>
    %c0_10 = arith.constant 0 : index
    %c0_11 = arith.constant 0 : index
    %21 = vector.load %arg6[%c0_10, %c0_11] : memref<1x8xf32, #tpu.memory_space<vmem>>, vector<1x8xf32>
    %22 = vector.broadcast %21 : vector<1x8xf32> to vector<16x8xf32>
    %23 = arith.addf %20, %22 : vector<16x8xf32>
    %c0_12 = arith.constant 0 : index
    %c0_13 = arith.constant 0 : index
    %24 = vector.load %arg7[%c0_12, %c0_13] : memref<16x8xf32, #tpu.memory_space<vmem>>, vector<16x8xf32>
    tpu.vector_store %arg7[%c0_12, %c0_13], %23 {strides = array<i32>} : memref<16x8xf32, #tpu.memory_space<vmem>>, vector<16x8xf32>,
    return
  }
  func.func @transform_0(%arg0: i32, %arg1: i32) -> (i32, i32) {
    %c0_i32 = arith.constant 0 : i32
    return %arg0, %arg1 : i32, i32
  }
  func.func @transform_1(%arg0: i32, %arg1: i32) -> (i32, i32) {
    %c0_i32 = arith.constant 0 : i32
    %c0_i32_0 = arith.constant 0 : i32
    return %arg1, %c0_i32 : i32, i32
  }
  func.func @transform_2(%arg0: i32, %arg1: i32) -> (i32, i32) {
    %c0_i32 = arith.constant 0 : i32
    %c0_i32_0 = arith.constant 0 : i32
    %c0_i32_1 = arith.constant 0 : i32
    return %c0_i32, %c0_i32_0 : i32, i32
  }
  func.func @transform_3(%arg0: i32, %arg1: i32) -> (i32, i32) {
    %c0_i32 = arith.constant 0 : i32
    %c0_i32_0 = arith.constant 0 : i32
    %c0_i32_1 = arith.constant 0 : i32
    return %c0_i32, %c0_i32_0 : i32, i32
  }
  func.func @transform_4(%arg0: i32, %arg1: i32) -> (i32, i32) {
    %c0_i32 = arith.constant 0 : i32
    %c0_i32_0 = arith.constant 0 : i32
    %c0_i32_1 = arith.constant 0 : i32
    return %c0_i32, %c0_i32_0 : i32, i32
  }
  func.func @transform_5(%arg0: i32, %arg1: i32) -> (i32, i32) {
    %c0_i32 = arith.constant 0 : i32
    %c0_i32_0 = arith.constant 0 : i32
    return %arg0, %c0_i32 : i32, i32
  }
}

module attributes {stable_mosaic.version = 11 : i64} {
  func.func @attention_lstm_kernel(%arg0: i32, %arg1: i32, %arg2: memref<16x16xbf16, #tpu.memory_space<vmem>>, %arg3: memref<16x128xbf16, #tpu.memory_space<vmem>>, %arg4: memref<1x128xf32, #tpu.memory_space<vmem>>, %arg5: memref<128x128xf32, #tpu.memory_space<vmem>>, %arg6: memref<1x8xf32, #tpu.memory_space<vmem>>, %arg7: memref<16x8xf32, #tpu.memory_space<vmem>>) attributes {dimension_semantics = [#tpu.dimension_semantics<parallel>, #tpu.dimension_semantics<arbitrary>], iteration_bounds = array<i64: 1, 1>, scalar_prefetch = 0 : i64, scratch_operands = 0 : i64, tpu.core_type = #tpu.core_type<tc>, window_params = [{transform_indices = @transform_0, window_bounds = array<i64: 16, 16>}, {transform_indices = @transform_1, window_bounds = array<i64: 16, 128>}, {pipeline_mode = #tpu.pipeline_mode<synchronous>, transform_indices = @transform_2, window_bounds = array<i64: 1, 128>}, {pipeline_mode = #tpu.pipeline_mode<synchronous>, transform_indices = @transform_3, window_bounds = array<i64: 128, 128>}, {pipeline_mode = #tpu.pipeline_mode<synchronous>, transform_indices = @transform_4, window_bounds = array<i64: 1, 8>}, {transform_indices = @transform_5, window_bounds = array<i64: 16, 8>}]} {
    %c0 = arith.constant 0 : index
    %c0_0 = arith.constant 0 : index
    %0 = vector.load %arg2[%c0, %c0_0] : memref<16x16xbf16, #tpu.memory_space<vmem>>, vector<16x16xbf16>
    %c0_1 = arith.constant 0 : index
    %c0_2 = arith.constant 0 : index
    %1 = vector.load %arg3[%c0_1, %c0_2] : memref<16x128xbf16, #tpu.memory_space<vmem>>, vector<16x128xbf16>
    %cst = arith.constant dense<0.000000e+00> : vector<16x128xf32>
    %2 = tpu.matmul %0, %1, %cst {dimension_numbers = #tpu.dot_dimension_numbers<[1], [0], [0], [1], [0, 0, 1, 1], [], []>} : vector<16x16xbf16>, vector<16x128xbf16>, vector<16x128xf32> -> vector<16x128xf32>
    %c0_3 = arith.constant 0 : index
    %c0_4 = arith.constant 0 : index
    %3 = vector.load %arg4[%c0_3, %c0_4] : memref<1x128xf32, #tpu.memory_space<vmem>>, vector<1x128xf32>
    %4 = vector.broadcast %3 : vector<1x128xf32> to vector<16x128xf32>
    %5 = arith.addf %2, %4 : vector<16x128xf32>
    %cst_5 = arith.constant 0.000000e+00 : f32
    %6 = vector.broadcast %cst_5 : f32 to vector<16x128xf32>
    %7 = arith.subf %6, %5 : vector<16x128xf32>
    %8 = math.exp %7 : vector<16x128xf32>
    %cst_6 = arith.constant 1.000000e+00 : f32
    %9 = vector.broadcast %cst_6 : f32 to vector<16x128xf32>
    %10 = arith.addf %9, %8 : vector<16x128xf32>
    %11 = tpu.reciprocal %10 {approx = true} : vector<16x128xf32> -> vector<16x128xf32>
    %12 = math.tanh %5 : vector<16x128xf32>
    %c124_i32 = arith.constant 124 : i32
    %13 = tpu.dynamic_rotate %12 by %c124_i32 dim 1 : vector<16x128xf32>, i32 -> vector<16x128xf32>
    %c120_i32 = arith.constant 120 : i32
    %14 = tpu.dynamic_rotate %11 by %c120_i32 dim 1 : vector<16x128xf32>, i32 -> vector<16x128xf32>
    %15 = arith.mulf %11, %13 : vector<16x128xf32>
    %16 = math.tanh %15 : vector<16x128xf32>
    %17 = arith.mulf %14, %16 : vector<16x128xf32>
    %c0_7 = arith.constant 0 : index
    %c0_8 = arith.constant 0 : index
    %18 = vector.load %arg5[%c0_7, %c0_8] : memref<128x128xf32, #tpu.memory_space<vmem>>, vector<128x128xf32>
    %cst_9 = arith.constant dense<0.000000e+00> : vector<16x128xf32>
    %19 = tpu.matmul %17, %18, %cst_9 {dimension_numbers = #tpu.dot_dimension_numbers<[1], [0], [0], [1], [0, 0, 1, 1], [], []>} : vector<16x128xf32>, vector<128x128xf32>, vector<16x128xf32> -> vector<16x128xf32>
    %20 = vector.extract_strided_slice %19 {offsets = [0, 0], sizes = [16, 8], strides = [1, 1]} : vector<16x128xf32> to vector<16x8xf32>
    %c0_10 = arith.constant 0 : index
    %c0_11 = arith.constant 0 : index
    %21 = vector.load %arg6[%c0_10, %c0_11] : memref<1x8xf32, #tpu.memory_space<vmem>>, vector<1x8xf32>
    %22 = vector.broadcast %21 : vector<1x8xf32> to vector<16x8xf32>
    %23 = arith.addf %20, %22 : vector<16x8xf32>
    %c0_12 = arith.constant 0 : index
    %c0_13 = arith.constant 0 : index
    %24 = vector.load %arg7[%c0_12, %c0_13] : memref<16x8xf32, #tpu.memory_space<vmem>>, vector<16x8xf32>
    tpu.vector_store %arg7[%c0_12, %c0_13], %23 {strides = array<i32>} : memref<16x8xf32, #tpu.memory_space<vmem>>, vector<16x8xf32>,
    return
  }
  func.func @transform_0(%arg0: i32, %arg1: i32) -> (i32, i32) {
    %c0_i32 = arith.constant 0 : i32
    return %arg0, %arg1 : i32, i32
  }
  func.func @transform_1(%arg0: i32, %arg1: i32) -> (i32, i32) {
    %c0_i32 = arith.constant 0 : i32
    %c0_i32_0 = arith.constant 0 : i32
    return %arg1, %c0_i32 : i32, i32
  }
  func.func @transform_2(%arg0: i32, %arg1: i32) -> (i32, i32) {
    %c0_i32 = arith.constant 0 : i32
    %c0_i32_0 = arith.constant 0 : i32
    %c0_i32_1 = arith.constant 0 : i32
    return %c0_i32, %c0_i32_0 : i32, i32
  }
  func.func @transform_3(%arg0: i32, %arg1: i32) -> (i32, i32) {
    %c0_i32 = arith.constant 0 : i32
    %c0_i32_0 = arith.constant 0 : i32
    %c0_i32_1 = arith.constant 0 : i32
    return %c0_i32, %c0_i32_0 : i32, i32
  }
  func.func @transform_4(%arg0: i32, %arg1: i32) -> (i32, i32) {
    %c0_i32 = arith.constant 0 : i32
    %c0_i32_0 = arith.constant 0 : i32
    %c0_i32_1 = arith.constant 0 : i32
    return %c0_i32, %c0_i32_0 : i32, i32
  }
  func.func @transform_5(%arg0: i32, %arg1: i32) -> (i32, i32) {
    %c0_i32 = arith.constant 0 : i32
    %c0_i32_0 = arith.constant 0 : i32
    return %arg0, %c0_i32 : i32, i32
  }
}

</mosaic_0001>

<llo_original>
// kernel: tpu_custom_call.1
$region0: #{tpu_custom_call.1}
  #allocation0 [shape = 'u32[]', space=smem, size = 0x4, offset = 0x4, fixed_abs, tag = 'smem constant byte address 0x4 - core index']
  #allocation1 [shape = 'u32[144,128]{1,0:T(1,128)}', space=vmem, size = 0x12000, scoped, tag = 'internal scratch']
  %s0 = inlined_call_operand.hbm [shape: bf16[16,16], index: 0, kind: input, shape index: {}]
  %s1 = inlined_call_operand.hbm [shape: bf16[16,128], index: 1, kind: input, shape index: {}]
  %s2 = inlined_call_operand.vmem [shape: f32[1,128], index: 2, kind: input, shape index: {}]
  %s3 = inlined_call_operand.hbm [shape: f32[128,128], index: 3, kind: input, shape index: {}]
  %s4 = inlined_call_operand.vmem [shape: f32[1,8], index: 4, kind: input, shape index: {}]
  %s5 = inlined_call_operand.vmem [shape: f32[16,8], index: 5, kind: output, shape index: {}]
  %s6 = sld [smem:[#allocation0]]
  $region42: #{tpu_custom_call.1} parent=0
    _
  %s8 = ssub.s32 1, %s6
  %s9 = scalar_select 0, %s8, %s6
  $region1: #{tpu_custom_call.1} parent=0
    #allocation2 [shape = 'u8[4096]{0}', space=vmem, size = 0x1000, scoped, tag = 'input window, operand 0, single buffered']
    #allocation3 [shape = 's32[1]{0}', space=sflag, size = 0x4, scoped, tag = 'scoped memory for tpu_custom_call.1']
    #allocation4 [shape = 'u8[4096]{0}', space=vmem, size = 0x1000, scoped, tag = 'input window, operand 1, single buffered']
    #allocation5 [shape = 's32[1]{0}', space=sflag, size = 0x4, scoped, tag = 'scoped memory for tpu_custom_call.1']
    #allocation6 [shape = 'u8[65536]{0}', space=vmem, size = 0x10000, scoped, tag = 'input window, operand 3, single buffered']
    %10 = vsyncpa [#allocation3], 0
    %11 = vsyncpa [#allocation5], 0
    // Predicated region
    $region2: #{tpu_custom_call.1} parent=1 // pred_check
      _
    $region3: #{tpu_custom_call.1} parent=1 // pred_check_branch
      %13 = sbr.rel (0) target = $region5
    $region4: #{tpu_custom_call.1} parent=1 // pred_region
      %s15 = ssub.s32 128, 128
      %16 = vsyncadd [#allocation3], %s15
      %s17 = sshll.u32 [#allocation2], 4
      %s18 = int_to_ptr.vmem [resolvable:$true] %s17
      %23 = dma.hbm_to_vmem [thread:$0]  %s0, 128, %s18, [#allocation3], 64, 64, 4
    $region5: #{tpu_custom_call.1} parent=1 // pred_fallthru
      _
    // Predicated region
    $region6: #{tpu_custom_call.1} parent=1 // pred_check
      _
    $region7: #{tpu_custom_call.1} parent=1 // pred_check_branch
      %25 = sbr.rel (0) target = $region9
    $region8: #{tpu_custom_call.1} parent=1 // pred_region
      %s27 = ssub.s32 128, 128
      %28 = vsyncadd [#allocation5], %s27
      %s29 = sshll.u32 [#allocation4], 4
      %s30 = int_to_ptr.vmem [resolvable:$true] %s29
      %35 = dma.hbm_to_vmem [thread:$0]  %s1, 128, %s30, [#allocation5], 64, 64, 4
    $region9: #{tpu_custom_call.1} parent=1 // pred_fallthru
      _
    // Predicated region
    $region10: #{tpu_custom_call.1} parent=1 // pred_check
      _
    $region11: #{tpu_custom_call.1} parent=1 // pred_check_branch
      %37 = sbr.rel (0) target = $region13
    $region12: #{tpu_custom_call.1} parent=1 // pred_region
      _
    $region13: #{tpu_custom_call.1} parent=1 // pred_fallthru
      _
    // Predicated region
    $region14: #{tpu_custom_call.1} parent=1 // pred_check
      _
    $region15: #{tpu_custom_call.1} parent=1 // pred_check_branch
      %39 = sbr.rel (0) target = $region17
    $region16: #{tpu_custom_call.1} parent=1 // pred_region
      %s41 = ssub.s32 2048, 2048
      %42 = vsyncadd [#allocation5], %s41
      %s43 = sshll.u32 [#allocation6], 4
      %s44 = int_to_ptr.vmem [resolvable:$true] %s43
      %49 = dma.hbm_to_vmem [thread:$0]  %s3, 2048, %s44, [#allocation5], 128, 128, 8
    $region17: #{tpu_custom_call.1} parent=1 // pred_fallthru
      _
    // Predicated region
    $region18: #{tpu_custom_call.1} parent=1 // pred_check
      _
    $region19: #{tpu_custom_call.1} parent=1 // pred_check_branch
      %51 = sbr.rel (0) target = $region21
    $region20: #{tpu_custom_call.1} parent=1 // pred_region
      _
    $region21: #{tpu_custom_call.1} parent=1 // pred_fallthru
      _
    // Predicated region
    $region22: #{tpu_custom_call.1} parent=1 // pred_check
      _
    $region23: #{tpu_custom_call.1} parent=1 // pred_check_branch
      %53 = sbr.rel (0) target = $region25
    $region24: #{tpu_custom_call.1} parent=1 // pred_region
      %54 = dma.done [#allocation3], 128
    $region25: #{tpu_custom_call.1} parent=1 // pred_fallthru
      _
    // Predicated region
    $region26: #{tpu_custom_call.1} parent=1 // pred_check
      _
    $region27: #{tpu_custom_call.1} parent=1 // pred_check_branch
      %56 = sbr.rel (0) target = $region29
    $region28: #{tpu_custom_call.1} parent=1 // pred_region
      %57 = dma.done [#allocation5], 128
    $region29: #{tpu_custom_call.1} parent=1 // pred_fallthru
      _
    // Predicated region
    $region30: #{tpu_custom_call.1} parent=1 // pred_check
      _
    $region31: #{tpu_custom_call.1} parent=1 // pred_check_branch
      %59 = sbr.rel (0) target = $region33
    $region32: #{tpu_custom_call.1} parent=1 // pred_region
      %60 = dma.done [#allocation5], 2048
    $region33: #{tpu_custom_call.1} parent=1 // pred_fallthru
      _
    %v62 = vld [vmem:[#allocation2] sm:$0xf]
    %v63 = vld [vmem:[#allocation2 + $0x4] sm:$0xf]
    %v64 = vld [vmem:[#allocation4] sm:$0xf]
    %v65 = vld [vmem:[#allocation4 + $0x4] sm:$0xf]
    %v66 = vld [vmem:[%s2] sm:$0x1]
    %v68 = vlaneseq
    %v69 = vshrl.u32 %v68, 7
    %v70 = vsub.s32 0, %v69
    %v71 = vrot.slane %v66, %v70
    %v75 = vunpack.c.l.b16 %v62
    %v76 = vunpack.c.l.b16 %v63
    %v77 = vpack.c.b16 %v76, %v75
    %v80 = vunpack.c.l.b16 %v64
    %v81 = vunpack.c.l.b16 %v65
    %v82 = vpack.c.b16 %v81, %v80
    %vm84 = vcmask 130048
    %v86 = vsel %vm84, %v77, 0
    %88 = vmatprep.subr.bf16.mxu0 0
    %89 = vmatpush1.bf16.msra.mxu0 0
    %90 = vmatprep.subr.bf16.mxu0 0
    %91 = vmatpush1.bf16.msra.mxu0 0
    %92 = vmatprep.subr.bf16.mxu0 0
    %93 = vmatpush1.bf16.msra.mxu0 0
    %94 = vmatprep.subr.bf16.mxu0 0
    %95 = vmatpush1.bf16.msra.mxu0 0
    %96 = vmatprep.subr.bf16.mxu0 0
    %97 = vmatpush1.bf16.msra.mxu0 0
    %98 = vmatprep.subr.bf16.mxu0 0
    %99 = vmatpush1.bf16.msra.mxu0 0
    %100 = vmatprep.subr.bf16.mxu0 0
    %101 = vmatpush1.bf16.msra.mxu0 0
    %102 = vmatprep.subr.bf16.mxu0 0
    %103 = vmatpush1.bf16.msra.mxu0 %v82
    %104 = vmatprep.subr.bf16.mxu0 0
    %105 = vmatpush2.bf16.msra.mxu0 0
    %106 = vmatprep.subr.bf16.mxu0 0
    %107 = vmatpush2.bf16.msra.mxu0 0
    %108 = vmatprep.subr.bf16.mxu0 0
    %109 = vmatpush2.bf16.msra.mxu0 0
    %110 = vmatprep.subr.bf16.mxu0 0
    %111 = vmatpush2.bf16.msra.mxu0 0
    %112 = vmatprep.subr.bf16.mxu0 0
    %113 = vmatpush2.bf16.msra.mxu0 0
    %114 = vmatprep.subr.bf16.mxu0 0
    %115 = vmatpush2.bf16.msra.mxu0 0
    %116 = vmatprep.subr.bf16.mxu0 0
    %117 = vmatpush2.bf16.msra.mxu0 0
    %118 = vmatprep.subr.bf16.mxu0 0
    %119 = vmatpush2.bf16.msra.mxu0 0
    %120 = vmatprep.mubr.bf16.mxu0 0
    %121 = vmatmul.mubr.bf16.gmra.mxu0 %v86
    %v122 = vpop.f32.mrf.mxu0
    %v123 = vadd.f32 %v71, %v122
    %v124 = vpop.f32.mrf.mxu0
    %v125 = vpop.f32.mrf.mxu0
    %v126 = vadd.f32 %v71, %v125
    %v127 = vpop.f32.mrf.mxu0
    %128 = vdwg.mxu0
    %v129 = vsub.f32 0.0, %v123
    %v130 = vsub.f32 0.0, %v126
    %v131 = vmul.f32 %v129, 1.442695
    %v132 = vpow.pop %v131
    %v133 = vmul.f32 %v130, 1.442695
    %v134 = vpow.pop %v133
    %v135 = vadd.f32 %v132, 1.0
    %v136 = vadd.f32 %v134, 1.0
    %v137 = vrcp.pop %v135
    %v138 = vrcp.pop %v136
    %v139 = vtanh.pop %v123
    %v140 = vtanh.pop %v126
    %141 = vrot.lane.b32.xlu0 %v139, 124
    %v142 = vpop.permute.xlu0 %141
    %143 = vrot.lane.b32.xlu0 %v140, 124
    %v144 = vpop.permute.xlu0 %143
    %145 = vrot.lane.b32.xlu0 %v137, 120
    %v146 = vpop.permute.xlu0 %145
    %147 = vrot.lane.b32.xlu0 %v138, 120
    %v148 = vpop.permute.xlu0 %147
    %v149 = vmul.f32 %v137, %v142
    %v150 = vmul.f32 %v138, %v144
    %v151 = vtanh.pop %v149
    %v152 = vtanh.pop %v150
    %v153 = vmul.f32 %v146, %v151
    %v154 = vmul.f32 %v148, %v152
    %v155 = vld [vmem:[#allocation6] sm:$0xff]
    %v156 = vld [vmem:[#allocation6 + $0x8] sm:$0xff]
    %v157 = vld [vmem:[#allocation6 + $0x10] sm:$0xff]
    %v158 = vld [vmem:[#allocation6 + $0x18] sm:$0xff]
    %v159 = vld [vmem:[#allocation6 + $0x20] sm:$0xff]
    %v160 = vld [vmem:[#allocation6 + $0x28] sm:$0xff]
    %v161 = vld [vmem:[#allocation6 + $0x30] sm:$0xff]
    %v162 = vld [vmem:[#allocation6 + $0x38] sm:$0xff]
    %v163 = vld [vmem:[#allocation6 + $0x40] sm:$0xff]
    %v164 = vld [vmem:[#allocation6 + $0x48] sm:$0xff]
    %v165 = vld [vmem:[#allocation6 + $0x50] sm:$0xff]
    %v166 = vld [vmem:[#allocation6 + $0x58] sm:$0xff]
    %v167 = vld [vmem:[#allocation6 + $0x60] sm:$0xff]
    %v168 = vld [vmem:[#allocation6 + $0x68] sm:$0xff]
    %v169 = vld [vmem:[#allocation6 + $0x70] sm:$0xff]
    %v170 = vld [vmem:[#allocation6 + $0x78] sm:$0xff]
    %171 = vmatprep.subr.mxu0 0.0
    %172 = vmatpush1.msra.mxu0 %v170
    %173 = vmatprep.subr.mxu0 0.0
    %174 = vmatpush1.msra.mxu0 %v169
    %175 = vmatprep.subr.mxu0 0.0
    %176 = vmatpush1.msra.mxu0 %v168
    %177 = vmatprep.subr.mxu0 0.0
    %178 = vmatpush1.msra.mxu0 %v167
    %179 = vmatprep.subr.mxu0 0.0
    %180 = vmatpush1.msra.mxu0 %v166
    %181 = vmatprep.subr.mxu0 0.0
    %182 = vmatpush1.msra.mxu0 %v165
    %183 = vmatprep.subr.mxu0 0.0
    %184 = vmatpush1.msra.mxu0 %v164
    %185 = vmatprep.subr.mxu0 0.0
    %186 = vmatpush1.msra.mxu0 %v163
    %187 = vmatprep.subr.mxu0 0.0
    %188 = vmatpush1.msra.mxu0 %v162
    %189 = vmatprep.subr.mxu0 0.0
    %190 = vmatpush1.msra.mxu0 %v161
    %191 = vmatprep.subr.mxu0 0.0
    %192 = vmatpush1.msra.mxu0 %v160
    %193 = vmatprep.subr.mxu0 0.0
    %194 = vmatpush1.msra.mxu0 %v159
    %195 = vmatprep.subr.mxu0 0.0
    %196 = vmatpush1.msra.mxu0 %v158
    %197 = vmatprep.subr.mxu0 0.0
    %198 = vmatpush1.msra.mxu0 %v157
    %199 = vmatprep.subr.mxu0 0.0
    %200 = vmatpush1.msra.mxu0 %v156
    %201 = vmatprep.subr.mxu0 0.0
    %202 = vmatpush1.msra.mxu0 %v155
    %203 = vmatprep.subr.mxu0 0.0
    %204 = vmatpush2.msra.mxu0 0.0
    %205 = vmatprep.subr.mxu0 0.0
    %206 = vmatpush2.msra.mxu0 0.0
    %207 = vmatprep.subr.mxu0 0.0
    %208 = vmatpush2.msra.mxu0 0.0
    %209 = vmatprep.subr.mxu0 0.0
    %210 = vmatpush2.msra.mxu0 0.0
    %211 = vmatprep.subr.mxu0 0.0
    %212 = vmatpush2.msra.mxu0 0.0
    %213 = vmatprep.subr.mxu0 0.0
    %214 = vmatpush2.msra.mxu0 0.0
    %215 = vmatprep.subr.mxu0 0.0
    %216 = vmatpush2.msra.mxu0 0.0
    %217 = vmatprep.subr.mxu0 0.0
    %218 = vmatpush2.msra.mxu0 0.0
    %219 = vmatprep.subr.mxu0 0.0
    %220 = vmatpush2.msra.mxu0 0.0
    %221 = vmatprep.subr.mxu0 0.0
    %222 = vmatpush2.msra.mxu0 0.0
    %223 = vmatprep.subr.mxu0 0.0
    %224 = vmatpush2.msra.mxu0 0.0
    %225 = vmatprep.subr.mxu0 0.0
    %226 = vmatpush2.msra.mxu0 0.0
    %227 = vmatprep.subr.mxu0 0.0
    %228 = vmatpush2.msra.mxu0 0.0
    %229 = vmatprep.subr.mxu0 0.0
    %230 = vmatpush2.msra.mxu0 0.0
    %231 = vmatprep.subr.mxu0 0.0
    %232 = vmatpush2.msra.mxu0 0.0
    %233 = vmatprep.subr.mxu0 0.0
    %234 = vmatpush2.msra.mxu0 0.0
    %235 = vmatprep.mubr.f32.mxu0 0.0
    %236 = vmatmul.mubr.f32.gmra.mxu0 %v153
    %v237 = vpop.f32.mrf.mxu0
    %v238 = vadd.f32 0.0, %v237
    %v239 = vpop.f32.mrf.mxu0
    %240 = vmatprep.mubr.f32.mxu0 0.0
    %241 = vmatmul.mubr.f32.gmra.mxu0 %v154
    %v242 = vpop.f32.mrf.mxu0
    %v243 = vadd.f32 0.0, %v242
    %v244 = vpop.f32.mrf.mxu0
    %245 = vdwg.mxu0
    %v246 = vld [vmem:[%s4] sm:$0x1]
    %v248 = vlaneseq
    %v249 = vshrl.u32 %v248, 7
    %v250 = vsub.s32 0, %v249
    %v251 = vrot.slane %v246, %v250
    %v253 = vadd.f32 %v238, %v251
    %v254 = vadd.f32 %v243, %v251
    %vm255 = vcmask 64512
    %256 = vst.msk [vmem:[%s5] sm:$0xff] %vm255, %v253
    %257 = vst.msk [vmem:[%s5 + $0x8] sm:$0xff] %vm255, %v254
    // Predicated region
    $region34: #{tpu_custom_call.1} parent=1 // pred_check
      _
    $region35: #{tpu_custom_call.1} parent=1 // pred_check_branch
      %259 = sbr.rel (0) target = $region37
    $region36: #{tpu_custom_call.1} parent=1 // pred_region
      _
    $region37: #{tpu_custom_call.1} parent=1 // pred_fallthru
      _
    // Predicated region
    $region38: #{tpu_custom_call.1} parent=1 // pred_check
      _
    $region39: #{tpu_custom_call.1} parent=1 // pred_check_branch
      %261 = sbr.rel (0) target = $region41
    $region40: #{tpu_custom_call.1} parent=1 // pred_region
      _
    $region41: #{tpu_custom_call.1} parent=1 // pred_fallthru
      _
    %262 = vsyncpa [#allocation3], 1
    %263 = vsyncpa [#allocation5], 1

// kernel: tpu_custom_call.1
$region0: #{tpu_custom_call.1}
  #allocation0 [shape = 'u32[]', space=smem, size = 0x4, offset = 0x4, fixed_abs, tag = 'smem constant byte address 0x4 - core index']
  #allocation1 [shape = 'u32[144,128]{1,0:T(1,128)}', space=vmem, size = 0x12000, scoped, tag = 'internal scratch']
  %s0 = inlined_call_operand.hbm [shape: bf16[16,16], index: 0, kind: input, shape index: {}]
  %s1 = inlined_call_operand.hbm [shape: bf16[16,128], index: 1, kind: input, shape index: {}]
  %s2 = inlined_call_operand.vmem [shape: f32[1,128], index: 2, kind: input, shape index: {}]
  %s3 = inlined_call_operand.hbm [shape: f32[128,128], index: 3, kind: input, shape index: {}]
  %s4 = inlined_call_operand.vmem [shape: f32[1,8], index: 4, kind: input, shape index: {}]
  %s5 = inlined_call_operand.vmem [shape: f32[16,8], index: 5, kind: output, shape index: {}]
  %s6 = sld [smem:[#allocation0]]
  $region42: #{tpu_custom_call.1} parent=0
    _
  %s8 = ssub.s32 1, %s6
  %s9 = scalar_select 0, %s8, %s6
  $region1: #{tpu_custom_call.1} parent=0
    #allocation2 [shape = 'u8[4096]{0}', space=vmem, size = 0x1000, scoped, tag = 'input window, operand 0, single buffered']
    #allocation3 [shape = 's32[1]{0}', space=sflag, size = 0x4, scoped, tag = 'scoped memory for tpu_custom_call.1']
    #allocation4 [shape = 'u8[4096]{0}', space=vmem, size = 0x1000, scoped, tag = 'input window, operand 1, single buffered']
    #allocation5 [shape = 's32[1]{0}', space=sflag, size = 0x4, scoped, tag = 'scoped memory for tpu_custom_call.1']
    #allocation6 [shape = 'u8[65536]{0}', space=vmem, size = 0x10000, scoped, tag = 'input window, operand 3, single buffered']
    %10 = vsyncpa [#allocation3], 0
    %11 = vsyncpa [#allocation5], 0
    // Predicated region
    $region2: #{tpu_custom_call.1} parent=1 // pred_check
      _
    $region3: #{tpu_custom_call.1} parent=1 // pred_check_branch
      %13 = sbr.rel (0) target = $region5
    $region4: #{tpu_custom_call.1} parent=1 // pred_region
      %s15 = ssub.s32 128, 128
      %16 = vsyncadd [#allocation3], %s15
      %s17 = sshll.u32 [#allocation2], 4
      %s18 = int_to_ptr.vmem [resolvable:$true] %s17
      %23 = dma.hbm_to_vmem [thread:$0]  %s0, 128, %s18, [#allocation3], 64, 64, 4
    $region5: #{tpu_custom_call.1} parent=1 // pred_fallthru
      _
    // Predicated region
    $region6: #{tpu_custom_call.1} parent=1 // pred_check
      _
    $region7: #{tpu_custom_call.1} parent=1 // pred_check_branch
      %25 = sbr.rel (0) target = $region9
    $region8: #{tpu_custom_call.1} parent=1 // pred_region
      %s27 = ssub.s32 128, 128
      %28 = vsyncadd [#allocation5], %s27
      %s29 = sshll.u32 [#allocation4], 4
      %s30 = int_to_ptr.vmem [resolvable:$true] %s29
      %35 = dma.hbm_to_vmem [thread:$0]  %s1, 128, %s30, [#allocation5], 64, 64, 4
    $region9: #{tpu_custom_call.1} parent=1 // pred_fallthru
      _
    // Predicated region
    $region10: #{tpu_custom_call.1} parent=1 // pred_check
      _
    $region11: #{tpu_custom_call.1} parent=1 // pred_check_branch
      %37 = sbr.rel (0) target = $region13
    $region12: #{tpu_custom_call.1} parent=1 // pred_region
      _
    $region13: #{tpu_custom_call.1} parent=1 // pred_fallthru
      _
    // Predicated region
    $region14: #{tpu_custom_call.1} parent=1 // pred_check
      _
    $region15: #{tpu_custom_call.1} parent=1 // pred_check_branch
      %39 = sbr.rel (0) target = $region17
    $region16: #{tpu_custom_call.1} parent=1 // pred_region
      %s41 = ssub.s32 2048, 2048
      %42 = vsyncadd [#allocation5], %s41
      %s43 = sshll.u32 [#allocation6], 4
      %s44 = int_to_ptr.vmem [resolvable:$true] %s43
      %49 = dma.hbm_to_vmem [thread:$0]  %s3, 2048, %s44, [#allocation5], 128, 128, 8
    $region17: #{tpu_custom_call.1} parent=1 // pred_fallthru
      _
    // Predicated region
    $region18: #{tpu_custom_call.1} parent=1 // pred_check
      _
    $region19: #{tpu_custom_call.1} parent=1 // pred_check_branch
      %51 = sbr.rel (0) target = $region21
    $region20: #{tpu_custom_call.1} parent=1 // pred_region
      _
    $region21: #{tpu_custom_call.1} parent=1 // pred_fallthru
      _
    // Predicated region
    $region22: #{tpu_custom_call.1} parent=1 // pred_check
      _
    $region23: #{tpu_custom_call.1} parent=1 // pred_check_branch
      %53 = sbr.rel (0) target = $region25
    $region24: #{tpu_custom_call.1} parent=1 // pred_region
      %54 = dma.done [#allocation3], 128
    $region25: #{tpu_custom_call.1} parent=1 // pred_fallthru
      _
    // Predicated region
    $region26: #{tpu_custom_call.1} parent=1 // pred_check
      _
    $region27: #{tpu_custom_call.1} parent=1 // pred_check_branch
      %56 = sbr.rel (0) target = $region29
    $region28: #{tpu_custom_call.1} parent=1 // pred_region
      %57 = dma.done [#allocation5], 128
    $region29: #{tpu_custom_call.1} parent=1 // pred_fallthru
      _
    // Predicated region
    $region30: #{tpu_custom_call.1} parent=1 // pred_check
      _
    $region31: #{tpu_custom_call.1} parent=1 // pred_check_branch
      %59 = sbr.rel (0) target = $region33
    $region32: #{tpu_custom_call.1} parent=1 // pred_region
      %60 = dma.done [#allocation5], 2048
    $region33: #{tpu_custom_call.1} parent=1 // pred_fallthru
      _
    %v62 = vld [vmem:[#allocation2] sm:$0xf]
    %v63 = vld [vmem:[#allocation2 + $0x4] sm:$0xf]
    %v64 = vld [vmem:[#allocation4] sm:$0xf]
    %v65 = vld [vmem:[#allocation4 + $0x4] sm:$0xf]
    %v66 = vld [vmem:[%s2] sm:$0x1]
    %v68 = vlaneseq
    %v69 = vshrl.u32 %v68, 7
    %v70 = vsub.s32 0, %v69
    %v71 = vrot.slane %v66, %v70
    %v75 = vunpack.c.l.b16 %v62
    %v76 = vunpack.c.l.b16 %v63
    %v77 = vpack.c.b16 %v76, %v75
    %v80 = vunpack.c.l.b16 %v64
    %v81 = vunpack.c.l.b16 %v65
    %v82 = vpack.c.b16 %v81, %v80
    %vm84 = vcmask 130048
    %v86 = vsel %vm84, %v77, 0
    %88 = vmatprep.subr.bf16.mxu0 0
    %89 = vmatpush1.bf16.msra.mxu0 0
    %90 = vmatprep.subr.bf16.mxu0 0
    %91 = vmatpush1.bf16.msra.mxu0 0
    %92 = vmatprep.subr.bf16.mxu0 0
    %93 = vmatpush1.bf16.msra.mxu0 0
    %94 = vmatprep.subr.bf16.mxu0 0
    %95 = vmatpush1.bf16.msra.mxu0 0
    %96 = vmatprep.subr.bf16.mxu0 0
    %97 = vmatpush1.bf16.msra.mxu0 0
    %98 = vmatprep.subr.bf16.mxu0 0
    %99 = vmatpush1.bf16.msra.mxu0 0
    %100 = vmatprep.subr.bf16.mxu0 0
    %101 = vmatpush1.bf16.msra.mxu0 0
    %102 = vmatprep.subr.bf16.mxu0 0
    %103 = vmatpush1.bf16.msra.mxu0 %v82
    %104 = vmatprep.subr.bf16.mxu0 0
    %105 = vmatpush2.bf16.msra.mxu0 0
    %106 = vmatprep.subr.bf16.mxu0 0
    %107 = vmatpush2.bf16.msra.mxu0 0
    %108 = vmatprep.subr.bf16.mxu0 0
    %109 = vmatpush2.bf16.msra.mxu0 0
    %110 = vmatprep.subr.bf16.mxu0 0
    %111 = vmatpush2.bf16.msra.mxu0 0
    %112 = vmatprep.subr.bf16.mxu0 0
    %113 = vmatpush2.bf16.msra.mxu0 0
    %114 = vmatprep.subr.bf16.mxu0 0
    %115 = vmatpush2.bf16.msra.mxu0 0
    %116 = vmatprep.subr.bf16.mxu0 0
    %117 = vmatpush2.bf16.msra.mxu0 0
    %118 = vmatprep.subr.bf16.mxu0 0
    %119 = vmatpush2.bf16.msra.mxu0 0
    %120 = vmatprep.mubr.bf16.mxu0 0
    %121 = vmatmul.mubr.bf16.gmra.mxu0 %v86
    %v122 = vpop.f32.mrf.mxu0
    %v123 = vadd.f32 %v71, %v122
    %v124 = vpop.f32.mrf.mxu0
    %v125 = vpop.f32.mrf.mxu0
    %v126 = vadd.f32 %v71, %v125
    %v127 = vpop.f32.mrf.mxu0
    %128 = vdwg.mxu0
    %v129 = vsub.f32 0.0, %v123
    %v130 = vsub.f32 0.0, %v126
    %v131 = vmul.f32 %v129, 1.442695
    %v132 = vpow.pop %v131
    %v133 = vmul.f32 %v130, 1.442695
    %v134 = vpow.pop %v133
    %v135 = vadd.f32 %v132, 1.0
    %v136 = vadd.f32 %v134, 1.0
    %v137 = vrcp.pop %v135
    %v138 = vrcp.pop %v136
    %v139 = vtanh.pop %v123
    %v140 = vtanh.pop %v126
    %141 = vrot.lane.b32.xlu0 %v139, 124
    %v142 = vpop.permute.xlu0 %141
    %143 = vrot.lane.b32.xlu0 %v140, 124
    %v144 = vpop.permute.xlu0 %143
    %145 = vrot.lane.b32.xlu0 %v137, 120
    %v146 = vpop.permute.xlu0 %145
    %147 = vrot.lane.b32.xlu0 %v138, 120
    %v148 = vpop.permute.xlu0 %147
    %v149 = vmul.f32 %v137, %v142
    %v150 = vmul.f32 %v138, %v144
    %v151 = vtanh.pop %v149
    %v152 = vtanh.pop %v150
    %v153 = vmul.f32 %v146, %v151
    %v154 = vmul.f32 %v148, %v152
    %v155 = vld [vmem:[#allocation6] sm:$0xff]
    %v156 = vld [vmem:[#allocation6 + $0x8] sm:$0xff]
    %v157 = vld [vmem:[#allocation6 + $0x10] sm:$0xff]
    %v158 = vld [vmem:[#allocation6 + $0x18] sm:$0xff]
    %v159 = vld [vmem:[#allocation6 + $0x20] sm:$0xff]
    %v160 = vld [vmem:[#allocation6 + $0x28] sm:$0xff]
    %v161 = vld [vmem:[#allocation6 + $0x30] sm:$0xff]
    %v162 = vld [vmem:[#allocation6 + $0x38] sm:$0xff]
    %v163 = vld [vmem:[#allocation6 + $0x40] sm:$0xff]
    %v164 = vld [vmem:[#allocation6 + $0x48] sm:$0xff]
    %v165 = vld [vmem:[#allocation6 + $0x50] sm:$0xff]
    %v166 = vld [vmem:[#allocation6 + $0x58] sm:$0xff]
    %v167 = vld [vmem:[#allocation6 + $0x60] sm:$0xff]
    %v168 = vld [vmem:[#allocation6 + $0x68] sm:$0xff]
    %v169 = vld [vmem:[#allocation6 + $0x70] sm:$0xff]
    %v170 = vld [vmem:[#allocation6 + $0x78] sm:$0xff]
    %171 = vmatprep.subr.mxu0 0.0
    %172 = vmatpush1.msra.mxu0 %v170
    %173 = vmatprep.subr.mxu0 0.0
    %174 = vmatpush1.msra.mxu0 %v169
    %175 = vmatprep.subr.mxu0 0.0
    %176 = vmatpush1.msra.mxu0 %v168
    %177 = vmatprep.subr.mxu0 0.0
    %178 = vmatpush1.msra.mxu0 %v167
    %179 = vmatprep.subr.mxu0 0.0
    %180 = vmatpush1.msra.mxu0 %v166
    %181 = vmatprep.subr.mxu0 0.0
    %182 = vmatpush1.msra.mxu0 %v165
    %183 = vmatprep.subr.mxu0 0.0
    %184 = vmatpush1.msra.mxu0 %v164
    %185 = vmatprep.subr.mxu0 0.0
    %186 = vmatpush1.msra.mxu0 %v163
    %187 = vmatprep.subr.mxu0 0.0
    %188 = vmatpush1.msra.mxu0 %v162
    %189 = vmatprep.subr.mxu0 0.0
    %190 = vmatpush1.msra.mxu0 %v161
    %191 = vmatprep.subr.mxu0 0.0
    %192 = vmatpush1.msra.mxu0 %v160
    %193 = vmatprep.subr.mxu0 0.0
    %194 = vmatpush1.msra.mxu0 %v159
    %195 = vmatprep.subr.mxu0 0.0
    %196 = vmatpush1.msra.mxu0 %v158
    %197 = vmatprep.subr.mxu0 0.0
    %198 = vmatpush1.msra.mxu0 %v157
    %199 = vmatprep.subr.mxu0 0.0
    %200 = vmatpush1.msra.mxu0 %v156
    %201 = vmatprep.subr.mxu0 0.0
    %202 = vmatpush1.msra.mxu0 %v155
    %203 = vmatprep.subr.mxu0 0.0
    %204 = vmatpush2.msra.mxu0 0.0
    %205 = vmatprep.subr.mxu0 0.0
    %206 = vmatpush2.msra.mxu0 0.0
    %207 = vmatprep.subr.mxu0 0.0
    %208 = vmatpush2.msra.mxu0 0.0
    %209 = vmatprep.subr.mxu0 0.0
    %210 = vmatpush2.msra.mxu0 0.0
    %211 = vmatprep.subr.mxu0 0.0
    %212 = vmatpush2.msra.mxu0 0.0
    %213 = vmatprep.subr.mxu0 0.0
    %214 = vmatpush2.msra.mxu0 0.0
    %215 = vmatprep.subr.mxu0 0.0
    %216 = vmatpush2.msra.mxu0 0.0
    %217 = vmatprep.subr.mxu0 0.0
    %218 = vmatpush2.msra.mxu0 0.0
    %219 = vmatprep.subr.mxu0 0.0
    %220 = vmatpush2.msra.mxu0 0.0
    %221 = vmatprep.subr.mxu0 0.0
    %222 = vmatpush2.msra.mxu0 0.0
    %223 = vmatprep.subr.mxu0 0.0
    %224 = vmatpush2.msra.mxu0 0.0
    %225 = vmatprep.subr.mxu0 0.0
    %226 = vmatpush2.msra.mxu0 0.0
    %227 = vmatprep.subr.mxu0 0.0
    %228 = vmatpush2.msra.mxu0 0.0
    %229 = vmatprep.subr.mxu0 0.0
    %230 = vmatpush2.msra.mxu0 0.0
    %231 = vmatprep.subr.mxu0 0.0
    %232 = vmatpush2.msra.mxu0 0.0
    %233 = vmatprep.subr.mxu0 0.0
    %234 = vmatpush2.msra.mxu0 0.0
    %235 = vmatprep.mubr.f32.mxu0 0.0
    %236 = vmatmul.mubr.f32.gmra.mxu0 %v153
    %v237 = vpop.f32.mrf.mxu0
    %v238 = vadd.f32 0.0, %v237
    %v239 = vpop.f32.mrf.mxu0
    %240 = vmatprep.mubr.f32.mxu0 0.0
    %241 = vmatmul.mubr.f32.gmra.mxu0 %v154
    %v242 = vpop.f32.mrf.mxu0
    %v243 = vadd.f32 0.0, %v242
    %v244 = vpop.f32.mrf.mxu0
    %245 = vdwg.mxu0
    %v246 = vld [vmem:[%s4] sm:$0x1]
    %v248 = vlaneseq
    %v249 = vshrl.u32 %v248, 7
    %v250 = vsub.s32 0, %v249
    %v251 = vrot.slane %v246, %v250
    %v253 = vadd.f32 %v238, %v251
    %v254 = vadd.f32 %v243, %v251
    %vm255 = vcmask 64512
    %256 = vst.msk [vmem:[%s5] sm:$0xff] %vm255, %v253
    %257 = vst.msk [vmem:[%s5 + $0x8] sm:$0xff] %vm255, %v254
    // Predicated region
    $region34: #{tpu_custom_call.1} parent=1 // pred_check
      _
    $region35: #{tpu_custom_call.1} parent=1 // pred_check_branch
      %259 = sbr.rel (0) target = $region37
    $region36: #{tpu_custom_call.1} parent=1 // pred_region
      _
    $region37: #{tpu_custom_call.1} parent=1 // pred_fallthru
      _
    // Predicated region
    $region38: #{tpu_custom_call.1} parent=1 // pred_check
      _
    $region39: #{tpu_custom_call.1} parent=1 // pred_check_branch
      %261 = sbr.rel (0) target = $region41
    $region40: #{tpu_custom_call.1} parent=1 // pred_region
      _
    $region41: #{tpu_custom_call.1} parent=1 // pred_fallthru
      _
    %262 = vsyncpa [#allocation3], 1
    %263 = vsyncpa [#allocation5], 1

</llo_original>
